<compile_context>
chip_gen: v7x
topology: tpu7x:2x2x1
jax: 0.10.0
libtpu: 0.0.40
codegen_flags: <defaults>
</compile_context>

<pallas_src>
import functools

import jax
import jax.numpy as jnp
from jax.experimental import pallas as pl
from jax.experimental.pallas import tpu as pltpu


def _round_up(x, m):
    return (x + m - 1) // m * m


def _cdiv(a, b):
    return (a + b - 1) // b


def _finalize(sum_sq, pi, out_ref, *, nc, p, t_pix, mask_lanes):
    # Per-pixel mean over all N*C slices (masked NC rows contributed 0).
    mse = jnp.sum(sum_sq, axis=0, keepdims=True) * (1.0 / nc)   # (1, t_pix)
    # 10*log10(dr^2 / (dr^2 * mse)) == -10*log10(mse)   (data_range cancels)
    psnr = -10.0 * jnp.log10(mse)
    if mask_lanes:
        lane = jax.lax.broadcasted_iota(jnp.int32, (1, t_pix), 1)
        psnr = jnp.where(lane + pi * t_pix < p, psnr, 0.0)
    tile_sum = jnp.sum(psnr)
    # Broadcast the per-tile partial PSNR sum over the whole small block;
    # the wrapper reads element [pi, 0, 0].
    out_ref[...] = jnp.broadcast_to(tile_sum, out_ref.shape)


def _psnr_kernel(t_ref, f_ref, out_ref, *scratch, nc, p, t_pix, b_nc,
                 n_nc_steps, mask_rows, mask_lanes):
    # Hoist grid-position reads out of any pl.when branch.
    pi = pl.program_id(0)
    ki = pl.program_id(1)

    # Cast to f32 in-kernel (inputs stay in native dtype in HBM) and clamp.
    t = jnp.clip(t_ref[...].astype(jnp.float32), 0.0, 1.0)
    f = jnp.clip(f_ref[...].astype(jnp.float32), 0.0, 1.0)
    d = t - f
    sq = d * d                                             # (b_nc, t_pix)

    if mask_rows:
        # Zero out-of-range NC rows of the ragged last block so garbage never
        # pollutes valid pixels (where() is a non-propagating select).
        row = jax.lax.broadcasted_iota(jnp.int32, (b_nc, 1), 0)
        sq = jnp.where(row + ki * b_nc < nc, sq, 0.0)

    if b_nc > 8:
        # Fold to an (8, t_pix) slab with sublane-aligned VPU adds so the
        # accumulator (and its per-step read/write traffic) stays small.
        folded = sq[0:8, :]
        for g in range(1, b_nc // 8):
            folded = folded + sq[g * 8:(g + 1) * 8, :]
        sq = folded

    fin = functools.partial(_finalize, pi=pi, out_ref=out_ref,
                            nc=nc, p=p, t_pix=t_pix, mask_lanes=mask_lanes)

    if n_nc_steps == 1:
        # Single NC step (common for small N*C): no accumulator, no phases.
        fin(sq)
    else:
        acc_ref, = scratch

        @pl.when(ki == 0)
        def _():
            acc_ref[...] = sq          # overwrite on first step (no zero pass)

        @pl.when(ki > 0)
        def _():
            acc_ref[...] += sq

        @pl.when(ki == n_nc_steps - 1)
        def _():
            fin(acc_ref[...])


def loss_psnr(im_true, im_fake, data_range=255.0, *, block_nc=None,
              tile_pix=None):
    # data_range cancels in the PSNR formula; kept for API compatibility.
    del data_range
    n, c, h, w = im_true.shape
    nc = n * c
    p = h * w

    itemsize = jnp.dtype(im_true.dtype).itemsize
    packing = 8 * max(1, 4 // itemsize)       # native sublane packing (rows)

    # Lane-dense pixel tile: capped so 2 inputs x 2 buffers + scratch stay
    # well under v7x's 64 MiB VMEM; split in two whenever possible so the
    # "parallel" pixel axis feeds both v7x TensorCores.
    T_PIX_MAX = 32768
    if tile_pix is not None:
        t_pix = tile_pix
    elif p <= 128:
        t_pix = 128
    else:
        t_pix = min(T_PIX_MAX, _round_up(_cdiv(p, 2), 128))

    # Dtype-aware NC block, sized so each grid step streams ~4 MiB per input.
    TARGET_BLOCK_BYTES = 4 * 1024 * 1024
    if block_nc is not None:
        b_nc = block_nc
    else:
        b_nc = max(packing,
                   (TARGET_BLOCK_BYTES // (t_pix * itemsize)) // packing * packing)
        b_nc = min(b_nc, _round_up(nc, packing))

    n_pix_tiles = _cdiv(p, t_pix)
    n_nc_tiles = _cdiv(nc, b_nc)
    # NOTE: when H*W is tiny but N*C is huge, making NC the parallel axis
    # (per-core partial sums) would help v7x further; not needed for images.

    # No host-side jnp.pad: ragged NC / pixel tails are masked in-kernel.
    t2 = im_true.reshape(nc, p)
    f2 = im_fake.reshape(nc, p)

    kernel = functools.partial(
        _psnr_kernel, nc=nc, p=p, t_pix=t_pix, b_nc=b_nc,
        n_nc_steps=n_nc_tiles,
        mask_rows=(nc % b_nc != 0),
        mask_lanes=(p % t_pix != 0),
    )
    scratch_shapes = ([] if n_nc_tiles == 1
                      else [pltpu.VMEM((8, t_pix), jnp.float32)])

    out = pl.pallas_call(
        kernel,
        out_shape=jax.ShapeDtypeStruct((n_pix_tiles, 8, 128), jnp.float32),
        grid_spec=pltpu.PrefetchScalarGridSpec(
            num_scalar_prefetch=0,
            grid=(n_pix_tiles, n_nc_tiles),
            in_specs=[
                pl.BlockSpec((b_nc, t_pix), lambda pi, ki: (ki, pi)),
                pl.BlockSpec((b_nc, t_pix), lambda pi, ki: (ki, pi)),
            ],
            out_specs=pl.BlockSpec((1, 8, 128), lambda pi, ki: (pi, 0, 0)),
            scratch_shapes=scratch_shapes,
        ),
        compiler_params=pltpu.CompilerParams(
            # pixel tiles are independent (megacore); NC is the reduction axis
            dimension_semantics=("parallel", "arbitrary"),
            vmem_limit_bytes=48 * 1024 * 1024,
        ),
    )(t2, f2)

    # Sum of per-tile PSNR partial sums over all valid pixels -> mean over HW.
    return jnp.sum(out[:, 0, 0]) / p


def _reference_psnr(im_true, im_fake, data_range=255.0):
    it = jnp.clip(im_true, 0.0, 1.0) * data_range
    ifk = jnp.clip(im_fake, 0.0, 1.0) * data_range
    err = (it - ifk) ** 2
    err = jnp.mean(err, axis=0)
    err = jnp.mean(err, axis=0)
    psnr = 10.0 * jnp.log10(data_range ** 2 / err)
    return jnp.mean(psnr)


if __name__ == "__main__":
    key = jax.random.PRNGKey(0)
    k1, k2, k3, k4 = jax.random.split(key, 4)

    # Primary check: small shape consistent with the module.
    shape = (2, 4, 16, 16)                       # N, C, H, W
    im_true = jax.random.uniform(k1, shape, dtype=jnp.float32)
    im_fake = jax.random.uniform(k2, shape, dtype=jnp.float32)
    out = jax.block_until_ready(loss_psnr(im_true, im_fake, data_range=255.0))
    ref = _reference_psnr(im_true, im_fake, data_range=255.0)
    assert jnp.allclose(out, ref, rtol=1e-5, atol=1e-4), (out, ref)

    # Ragged NC / pixel tails (in-kernel masking) + multi-step NC reduction.
    shape2 = (3, 5, 15, 13)                      # nc=15, p=195 (both ragged)
    a = jax.random.uniform(k3, shape2, dtype=jnp.float32)
    b = jax.random.uniform(k4, shape2, dtype=jnp.float32)
    ref2 = _reference_psnr(a, b)
    out2a = jax.block_until_ready(loss_psnr(a, b))                           # default tiling
    out2b = jax.block_until_ready(loss_psnr(a, b, block_nc=8, tile_pix=128))  # multi-NC-step
    out2c = jax.block_until_ready(loss_psnr(a, b, block_nc=16, tile_pix=128)) # fold (b_nc>8)
    assert jnp.allclose(out2a, ref2, rtol=1e-5, atol=1e-4), (out2a, ref2)
    assert jnp.allclose(out2b, ref2, rtol=1e-5, atol=1e-4), (out2b, ref2)
    assert jnp.allclose(out2c, ref2, rtol=1e-5, atol=1e-4), (out2c, ref2)

    print("KERNEL_OK")
</pallas_src>

<mosaic_0001>
module attributes {stable_mosaic.version = 11 : i64} {
  func.func @_psnr_kernel(%arg0: i32, %arg1: i32, %arg2: memref<8x128xf32, #tpu.memory_space<vmem>>, %arg3: memref<8x128xf32, #tpu.memory_space<vmem>>, %arg4: memref<1x8x128xf32, #tpu.memory_space<vmem>>) attributes {dimension_semantics = [#tpu.dimension_semantics<parallel>, #tpu.dimension_semantics<arbitrary>], iteration_bounds = array<i64: 2, 1>, scalar_prefetch = 0 : i64, scratch_operands = 0 : i64, tpu.core_type = #tpu.core_type<tc>, window_params = [{transform_indices = @transform_0, window_bounds = array<i64: 8, 128>}, {transform_indices = @transform_1, window_bounds = array<i64: 8, 128>}, {transform_indices = @transform_2, window_bounds = array<i64: 1, 8, 128>}]} {
    %c0 = arith.constant 0 : index
    %c0_0 = arith.constant 0 : index
    %0 = vector.load %arg2[%c0, %c0_0] : memref<8x128xf32, #tpu.memory_space<vmem>>, vector<8x128xf32>
    %cst = arith.constant 0.000000e+00 : f32
    %cst_1 = arith.constant 1.000000e+00 : f32
    %1 = vector.broadcast %cst : f32 to vector<8x128xf32>
    %2 = arith.maximumf %1, %0 : vector<8x128xf32>
    %3 = vector.broadcast %cst_1 : f32 to vector<8x128xf32>
    %4 = arith.minimumf %3, %2 : vector<8x128xf32>
    %c0_2 = arith.constant 0 : index
    %c0_3 = arith.constant 0 : index
    %5 = vector.load %arg3[%c0_2, %c0_3] : memref<8x128xf32, #tpu.memory_space<vmem>>, vector<8x128xf32>
    %cst_4 = arith.constant 0.000000e+00 : f32
    %cst_5 = arith.constant 1.000000e+00 : f32
    %6 = vector.broadcast %cst_4 : f32 to vector<8x128xf32>
    %7 = arith.maximumf %6, %5 : vector<8x128xf32>
    %8 = vector.broadcast %cst_5 : f32 to vector<8x128xf32>
    %9 = arith.minimumf %8, %7 : vector<8x128xf32>
    %10 = arith.subf %4, %9 : vector<8x128xf32>
    %11 = arith.mulf %10, %10 : vector<8x128xf32>
    %cst_6 = arith.constant dense<0.000000e+00> : vector<128xf32>
    %12 = vector.multi_reduction <add>, %11, %cst_6 [0] : vector<8x128xf32> to vector<128xf32>
    %13 = vector.shape_cast %12 : vector<128xf32> to vector<1x128xf32>
    %cst_7 = arith.constant 1.250000e-01 : f32
    %14 = vector.broadcast %cst_7 : f32 to vector<1x128xf32>
    %15 = arith.mulf %13, %14 : vector<1x128xf32>
    %16 = math.log %15 : vector<1x128xf32>
    %cst_8 = arith.constant 0.434294492 : f32
    %17 = vector.broadcast %cst_8 : f32 to vector<1x128xf32>
    %18 = arith.mulf %16, %17 : vector<1x128xf32>
    %cst_9 = arith.constant -1.000000e+01 : f32
    %19 = vector.broadcast %cst_9 : f32 to vector<1x128xf32>
    %20 = arith.mulf %19, %18 : vector<1x128xf32>
    %21 = vector.shape_cast %20 : vector<1x128xf32> to vector<1x1x128xf32>
    %cst_10 = arith.constant dense<0.000000e+00> : vector<1xf32>
    %22 = vector.multi_reduction <add>, %21, %cst_10 [1, 2] : vector<1x1x128xf32> to vector<1xf32>
    %23 = vector.shape_cast %22 : vector<1xf32> to vector<1x1x1xf32>
    %24 = vector.extract %23[0, 0, 0] : f32 from vector<1x1x1xf32>
    %25 = vector.broadcast %24 : f32 to vector<1x8x128xf32>
    %c0_11 = arith.constant 0 : index
    %c0_12 = arith.constant 0 : index
    %c0_13 = arith.constant 0 : index
    %26 = vector.load %arg4[%c0_11, %c0_12, %c0_13] : memref<1x8x128xf32, #tpu.memory_space<vmem>>, vector<1x8x128xf32>
    tpu.vector_store %arg4[%c0_11, %c0_12, %c0_13], %25 {strides = array<i32>} : memref<1x8x128xf32, #tpu.memory_space<vmem>>, vector<1x8x128xf32>,
    return
  }
  func.func @transform_0(%arg0: i32, %arg1: i32) -> (i32, i32) {
    %c0_i32 = arith.constant 0 : i32
    return %arg1, %arg0 : i32, i32
  }
  func.func @transform_1(%arg0: i32, %arg1: i32) -> (i32, i32) {
    %c0_i32 = arith.constant 0 : i32
    return %arg1, %arg0 : i32, i32
  }
  func.func @transform_2(%arg0: i32, %arg1: i32) -> (i32, i32, i32) {
    %c0_i32 = arith.constant 0 : i32
    %c0_i32_0 = arith.constant 0 : i32
    %c0_i32_1 = arith.constant 0 : i32
    return %arg0, %c0_i32, %c0_i32_0 : i32, i32, i32
  }
}

</mosaic_0001>

<llo_original>
// kernel: tpu_custom_call.1
$region0: #{tpu_custom_call.1}
  #allocation0 [shape = 'u32[]', space=smem, size = 0x4, offset = 0x4, fixed_abs, tag = 'smem constant byte address 0x4 - core index']
  #allocation1 [shape = 'u32[144,128]{1,0:T(1,128)}', space=vmem, size = 0x12000, scoped, tag = 'internal scratch']
  %s0 = inlined_call_operand.hbm [shape: f32[8,256], index: 0, kind: input, shape index: {}]
  %s1 = inlined_call_operand.hbm [shape: f32[8,256], index: 1, kind: input, shape index: {}]
  %s2 = inlined_call_operand.hbm [shape: f32[2,8,128], index: 2, kind: output, shape index: {}]
  %s3 = sld [smem:[#allocation0]]
  $region49: #{tpu_custom_call.1} parent=0
    _
  %s5 = ssub.s32 1, %s3
  %s6 = scalar_select 0, %s5, %s3
  $region1: #{tpu_custom_call.1} parent=0
    #allocation2 [shape = 'u8[8192]{0}', space=vmem, size = 0x2000, scoped, tag = 'input window, operand 0']
    #allocation3 [shape = 's32[2]{0}', space=sflag, size = 0x8, scoped, tag = 'scoped memory for tpu_custom_call.1']
    #allocation4 [shape = 's32[2]{0}', space=sflag, size = 0x8, scoped, tag = 'scoped memory for tpu_custom_call.1']
    #allocation5 [shape = 'u8[8192]{0}', space=vmem, size = 0x2000, scoped, tag = 'input window, operand 1']
    #allocation6 [shape = 's32[2]{0}', space=sflag, size = 0x8, scoped, tag = 'scoped memory for tpu_custom_call.1']
    #allocation7 [shape = 'u8[8192]{0}', space=vmem, size = 0x2000, scoped, tag = 'output window, operand 0']
    %7 = vsyncpa [#allocation3], 0
    %s8 = scalar_lea.sflag [#allocation3], 1
    %9 = vsyncpa %s8, 0
    %10 = vsyncpa [#allocation6], 0
    %s11 = scalar_lea.sflag [#allocation6], 1
    %12 = vsyncpa %s11, 0
    %13 = vsyncpa [#allocation4], 0
    %s14 = scalar_lea.sflag [#allocation4], 1
    %15 = vsyncpa %s14, 0
    loop: start=0, step=1, limit=4
    $region2: #{tpu_custom_call.1} parent=1 // loop_pre_header
      _
    $region3: #{tpu_custom_call.1} parent=1 // loop_header
      %s17 = sphi 0, %s21
      %p18 = scmp.ge.s32.totalorder %s17, 4
      %s24 = sphi 0, %s36
      %s25 = sphi 0, %s32
      %s26 = sphi 0, %s24
      %s27 = sphi 0, %s25
      %s28 = sphi 0, %s26
      %s29 = sphi 0, %s27
      %s41 = sphi 0, %s43
      %s44 = sphi 0, %s41
      %s45 = sphi 0, %s44
      %s61 = sphi 0, %s45
      %s69 = sphi 0, %s71
      %s72 = sphi 0, %s69
      %s73 = sphi 0, %s72
      %s89 = sphi 0, %s73
      %s95 = sphi 0, %s97
      %s98 = sphi 0, %s95
      %s99 = sphi 0, %s98
      %s115 = sphi 0, %s99
    $region4: #{tpu_custom_call.1} parent=1 // loop_header_branch
      %20 = sbr.rel (%p18) target = $region8
    $region5: #{tpu_custom_call.1} parent=1 // loop_body
      %s22 = ssub.s32 %s17, 1
      %s23 = ssub.s32 %s17, 2
      %s30 = sadd.s32 1, %s25
      %p31 = scmp.ge.s32.totalorder %s30, 1
      %s32 = scalar_select %p31, 0, %s30
      %s33 = sadd.s32 1, %s24
      %s34 = scalar_select %p31, %s33, %s24
      %p35 = scmp.ge.s32.totalorder %s34, 2
      %s36 = scalar_select %p35, 0, %s34
      %s37 = ssub.s32 %s25, %s32
      %s38 = ssub.s32 %s24, %s36
      %s39 = sor.u32 %s37, %s38
      %p40 = scmp.eq.s32.totalorder %s39, 0
      %s42 = sadd.s32 %s41, 1
      %s43 = scalar_select %p40, %s41, %s42
      %p46 = pneg %p40
      %p47 = scmp.eq.s32.totalorder %s17, 1
      %p48 = por %p46, %p47
      %p49 = scmp.ne.s32.totalorder %s41, %s44
      %p50 = scmp.eq.s32.totalorder %s17, 0
      %p51 = por %p49, %p50
      %p52 = scmp.ne.s32.totalorder %s41, %s44
      %p53 = scmp.eq.s32.totalorder %s22, 1
      %p54 = por %p52, %p53
      %p55 = scmp.ne.s32.totalorder %s44, %s45
      %p56 = scmp.eq.s32.totalorder %s22, 0
      %p57 = por %p55, %p56
      %p58 = scmp.ne.s32.totalorder %s44, %s45
      %p59 = scmp.eq.s32.totalorder %s23, 1
      %p60 = por %p58, %p59
      %p62 = scmp.ne.s32.totalorder %s45, %s61
      %p63 = scmp.eq.s32.totalorder %s23, 0
      %p64 = por %p62, %p63
      %s65 = ssub.s32 %s25, %s32
      %s66 = ssub.s32 %s24, %s36
      %s67 = sor.u32 %s65, %s66
      %p68 = scmp.eq.s32.totalorder %s67, 0
      %s70 = sadd.s32 %s69, 1
      %s71 = scalar_select %p68, %s69, %s70
      %p74 = pneg %p68
      %p75 = scmp.eq.s32.totalorder %s17, 1
      %p76 = por %p74, %p75
      %p77 = scmp.ne.s32.totalorder %s69, %s72
      %p78 = scmp.eq.s32.totalorder %s17, 0
      %p79 = por %p77, %p78
      %p80 = scmp.ne.s32.totalorder %s69, %s72
      %p81 = scmp.eq.s32.totalorder %s22, 1
      %p82 = por %p80, %p81
      %p83 = scmp.ne.s32.totalorder %s72, %s73
      %p84 = scmp.eq.s32.totalorder %s22, 0
      %p85 = por %p83, %p84
      %p86 = scmp.ne.s32.totalorder %s72, %s73
      %p87 = scmp.eq.s32.totalorder %s23, 1
      %p88 = por %p86, %p87
      %p90 = scmp.ne.s32.totalorder %s73, %s89
      %p91 = scmp.eq.s32.totalorder %s23, 0
      %p92 = por %p90, %p91
      %s93 = ssub.s32 %s24, %s36
      %p94 = scmp.eq.s32.totalorder %s93, 0
      %s96 = sadd.s32 %s95, 1
      %s97 = scalar_select %p94, %s95, %s96
      %p100 = pneg %p94
      %p101 = scmp.eq.s32.totalorder %s17, 1
      %p102 = por %p100, %p101
      %p103 = scmp.ne.s32.totalorder %s95, %s98
      %p104 = scmp.eq.s32.totalorder %s17, 0
      %p105 = por %p103, %p104
      %p106 = scmp.ne.s32.totalorder %s95, %s98
      %p107 = scmp.eq.s32.totalorder %s22, 1
      %p108 = por %p106, %p107
      %p109 = scmp.ne.s32.totalorder %s98, %s99
      %p110 = scmp.eq.s32.totalorder %s22, 0
      %p111 = por %p109, %p110
      %p112 = scmp.ne.s32.totalorder %s98, %s99
      %p113 = scmp.eq.s32.totalorder %s23, 1
      %p114 = por %p112, %p113
      %p116 = scmp.ne.s32.totalorder %s99, %s115
      %p117 = scmp.eq.s32.totalorder %s23, 0
      %p118 = por %p116, %p117
      %p119 = scmp.le.s32.totalorder 1, %s17
      %p120 = scmp.lt.s32.totalorder %s17, 3
      %p121 = pnand %p119, %p120
      %p122 = pneg %p121
      // Predicated region
      $region9: #{tpu_custom_call.1} parent=5 // pred_check
        _
      $region10: #{tpu_custom_call.1} parent=5 // pred_check_branch
        %124 = sbr.rel (%p121) target = $region12
      $region11: #{tpu_custom_call.1} parent=5 // pred_region
        %s125 = ssub.s32 %s17, 1
      $region12: #{tpu_custom_call.1} parent=5 // pred_fallthru
        _
      %p126 = scmp.lt.s32.totalorder %s17, 2
      // Predicated region
      $region13: #{tpu_custom_call.1} parent=5 // pred_check
        %p127 = pneg %p126
      $region14: #{tpu_custom_call.1} parent=5 // pred_check_branch
        %129 = sbr.rel (%p127) target = $region16
      $region15: #{tpu_custom_call.1} parent=5 // pred_region
        // Predicated region
        $region17: #{tpu_custom_call.1} parent=15 // pred_check
          %p130 = pneg %p51
        $region18: #{tpu_custom_call.1} parent=15 // pred_check_branch
          %132 = sbr.rel (%p130) target = $region20
        $region19: #{tpu_custom_call.1} parent=15 // pred_region
          %s133 = sand.u32 %s41, 1
          %s134 = scalar_lea.sflag [#allocation3], %s133
          %s135 = sand.u32 %s41, 1
          %s136 = smul.addr %s135, 8
          %s137 = scalar_lea.vmem [#allocation2], %s136
          %s139 = ssub.s32 128, 128
          %140 = vsyncadd %s134, %s139
          %s141 = smul.addr %s25, 2
          %s142 = sadd.s32 %s24, %s141
          %s143 = smul.addr %s142, 128
          %s144 = scalar_lea.hbm %s0, %s143
          %s146 = sshll.u32 %s137, 4
          %s147 = int_to_ptr.vmem [resolvable:$true] %s146
          %149 = dma.hbm_to_vmem [thread:$0]  %s144, 128, %s147, %s134
        $region20: #{tpu_custom_call.1} parent=15 // pred_fallthru
          _
        // Predicated region
        $region21: #{tpu_custom_call.1} parent=15 // pred_check
          %p150 = pneg %p79
        $region22: #{tpu_custom_call.1} parent=15 // pred_check_branch
          %152 = sbr.rel (%p150) target = $region24
        $region23: #{tpu_custom_call.1} parent=15 // pred_region
          %s153 = sand.u32 %s69, 1
          %s154 = scalar_lea.sflag [#allocation6], %s153
          %s155 = sand.u32 %s69, 1
          %s156 = smul.addr %s155, 8
          %s157 = scalar_lea.vmem [#allocation5], %s156
          %s159 = ssub.s32 128, 128
          %160 = vsyncadd %s154, %s159
          %s161 = smul.addr %s25, 2
          %s162 = sadd.s32 %s24, %s161
          %s163 = smul.addr %s162, 128
          %s164 = scalar_lea.hbm %s1, %s163
          %s166 = sshll.u32 %s157, 4
          %s167 = int_to_ptr.vmem [resolvable:$true] %s166
          %169 = dma.hbm_to_vmem [thread:$0]  %s164, 128, %s167, %s154
        $region24: #{tpu_custom_call.1} parent=15 // pred_fallthru
          _
      $region16: #{tpu_custom_call.1} parent=5 // pred_fallthru
        _
      %p170 = scmp.le.s32.totalorder 1, %s17
      %p171 = scmp.lt.s32.totalorder %s17, 3
      %p172 = pnand %p170, %p171
      %p173 = pneg %p172
      // Predicated region
      $region25: #{tpu_custom_call.1} parent=5 // pred_check
        _
      $region26: #{tpu_custom_call.1} parent=5 // pred_check_branch
        %175 = sbr.rel (%p172) target = $region28
      $region27: #{tpu_custom_call.1} parent=5 // pred_region
        %s176 = ssub.s32 %s17, 1
        %s177 = sand.u32 %s44, 1
        %s178 = scalar_lea.sflag [#allocation3], %s177
        %s179 = sand.u32 %s44, 1
        %s180 = smul.addr %s179, 8
        %s181 = scalar_lea.vmem [#allocation2], %s180
        // Predicated region
        $region29: #{tpu_custom_call.1} parent=27 // pred_check
          %p182 = pneg %p57
        $region30: #{tpu_custom_call.1} parent=27 // pred_check_branch
          %184 = sbr.rel (%p182) target = $region32
        $region31: #{tpu_custom_call.1} parent=27 // pred_region
          %185 = dma.done %s178, 128
        $region32: #{tpu_custom_call.1} parent=27 // pred_fallthru
          _
        %s186 = sand.u32 %s72, 1
        %s187 = scalar_lea.sflag [#allocation6], %s186
        %s188 = sand.u32 %s72, 1
        %s189 = smul.addr %s188, 8
        %s190 = scalar_lea.vmem [#allocation5], %s189
        // Predicated region
        $region33: #{tpu_custom_call.1} parent=27 // pred_check
          %p191 = pneg %p85
        $region34: #{tpu_custom_call.1} parent=27 // pred_check_branch
          %193 = sbr.rel (%p191) target = $region36
        $region35: #{tpu_custom_call.1} parent=27 // pred_region
          %194 = dma.done %s187, 128
        $region36: #{tpu_custom_call.1} parent=27 // pred_fallthru
          _
        %s195 = sand.u32 %s44, 1
        %s196 = scalar_lea.sflag [#allocation3], %s195
        %s197 = sand.u32 %s44, 1
        %s198 = smul.addr %s197, 8
        %s199 = scalar_lea.vmem [#allocation2], %s198
        %p200 = pneg %p57
        %p201 = pneg %p54
        %s202 = sand.u32 %s72, 1
        %s203 = scalar_lea.sflag [#allocation6], %s202
        %s204 = sand.u32 %s72, 1
        %s205 = smul.addr %s204, 8
        %s206 = scalar_lea.vmem [#allocation5], %s205
        %p207 = pneg %p85
        %p208 = pneg %p82
        %p209 = pneg %p111
        %p210 = pneg %p108
        %s211 = sand.u32 %s98, 1
        %s212 = scalar_lea.sflag [#allocation4], %s211
        %s213 = sand.u32 %s98, 1
        %s214 = smul.addr %s213, 8
        %s215 = scalar_lea.vmem [#allocation7], %s214
        %v216 = vld [vmem:[%s181] sm:$0xff]
        %v217 = vmax.f32 %v216, 0.0
        %v218 = vmin.f32 %v217, 1.0
        %v219 = vld [vmem:[%s190] sm:$0xff]
        %v220 = vmax.f32 %v219, 0.0
        %v221 = vmin.f32 %v220, 1.0
        %v222 = vsub.f32 %v218, %v221
        %v223 = vmul.f32 %v222, %v222
        %v224 = vrot.slane %v223, 4
        %v225 = vadd.f32 %v223, %v224
        %v226 = vrot.slane %v225, 2
        %v227 = vadd.f32 %v225, %v226
        %v228 = vrot.slane %v227, 1
        %v229 = vadd.f32 %v227, %v228
        %v230 = vmul.f32 %v229, 0.125
        %v231 = vlog2.pop %v230
        %v232 = vmul.f32 %v231, 0.6931472
        %v233 = vmul.f32 %v232, 0.4342945
        %v234 = vmul.f32 %v233, -10.0
        %vm235 = vcmask 1040384
        %v236 = vsel %vm235, %v234, 0.0
        %237 = vadd.xlane.f32.xlu0 %v236
        %v238 = vpop.xlane.xlu0 %237
        %v239 = vrot.slane %v238, 4
        %v240 = vadd.f32 %v238, %v239
        %v241 = vrot.slane %v240, 2
        %v242 = vadd.f32 %v240, %v241
        %v243 = vrot.slane %v242, 1
        %v244 = vadd.f32 %v242, %v243
        %s245 = vtos %v244
        %v246 = vstv %s245
        %247 = vst [vmem:[%s215] sm:$0xff] %v246
        %s248 = sand.u32 %s98, 1
        %s249 = scalar_lea.sflag [#allocation4], %s248
        %s250 = sand.u32 %s98, 1
        %s251 = smul.addr %s250, 8
        %s252 = scalar_lea.vmem [#allocation7], %s251
        // Predicated region
        $region37: #{tpu_custom_call.1} parent=27 // pred_check
          %p253 = pneg %p108
        $region38: #{tpu_custom_call.1} parent=27 // pred_check_branch
          %255 = sbr.rel (%p253) target = $region40
        $region39: #{tpu_custom_call.1} parent=27 // pred_region
          %s257 = ssub.s32 128, 128
          %258 = vsyncadd %s249, %s257
          %s259 = smul.addr %s26, 128
          %s260 = scalar_lea.hbm %s2, %s259
          %s262 = sshll.u32 %s252, 4
          %s263 = int_to_ptr.vmem [resolvable:$true] %s262
          %265 = dma.vmem_to_hbm [thread:$0]  %s263, 128, %s260, %s249
        $region40: #{tpu_custom_call.1} parent=27 // pred_fallthru
          _
      $region28: #{tpu_custom_call.1} parent=5 // pred_fallthru
        _
      %p266 = scmp.le.s32.totalorder 2, %s17
      // Predicated region
      $region41: #{tpu_custom_call.1} parent=5 // pred_check
        %p267 = pneg %p266
      $region42: #{tpu_custom_call.1} parent=5 // pred_check_branch
        %269 = sbr.rel (%p267) target = $region44
      $region43: #{tpu_custom_call.1} parent=5 // pred_region
        %s270 = ssub.s32 %s17, 2
        // Predicated region
        $region45: #{tpu_custom_call.1} parent=43 // pred_check
          %p271 = pneg %p114
        $region46: #{tpu_custom_call.1} parent=43 // pred_check_branch
          %273 = sbr.rel (%p271) target = $region48
        $region47: #{tpu_custom_call.1} parent=43 // pred_region
          %s274 = sand.u32 %s99, 1
          %s275 = scalar_lea.sflag [#allocation4], %s274
          %s276 = sand.u32 %s99, 1
          %s277 = smul.addr %s276, 8
          %s278 = scalar_lea.vmem [#allocation7], %s277
          %279 = dma.done %s275, 128
        $region48: #{tpu_custom_call.1} parent=43 // pred_fallthru
          _
      $region44: #{tpu_custom_call.1} parent=5 // pred_fallthru
        _
    $region6: #{tpu_custom_call.1} parent=1 // loop_footer
      %s21 = sadd.s32 1, %s17
    $region7: #{tpu_custom_call.1} parent=1 // loop_footer_branch
      %16 = sbr.rel target = $region3
    $region8: #{tpu_custom_call.1} parent=1 // loop_exit
      _
    %280 = vsyncpa [#allocation3], 1
    %s281 = scalar_lea.sflag [#allocation3], 1
    %282 = vsyncpa %s281, 1
    %283 = vsyncpa [#allocation6], 1
    %s284 = scalar_lea.sflag [#allocation6], 1
    %285 = vsyncpa %s284, 1
    %286 = vsyncpa [#allocation4], 1
    %s287 = scalar_lea.sflag [#allocation4], 1
    %288 = vsyncpa %s287, 1

</llo_original>
